<compile_context>
chip_gen: v5e
topology: v5e:2x2
jax: 0.10.0
libtpu: 0.0.40
codegen_flags: <defaults>
</compile_context>

<pallas_src>
import numpy as np

import jax
import jax.numpy as jnp
from jax.experimental import pallas as pl
from jax.experimental.pallas import tpu as pltpu

_LANE = 128
_MAX_BLOCK_BYTES = 4 * 1024 * 1024     # ~4 MiB per block
_VMEM_LIMIT_BYTES = 32 * 1024 * 1024   # 4 double-buffered 4 MiB blocks + slack


# ---------------------------------------------------------------------------
# Pallas kernel: element-wise invert on a (block_rows, 128) tile
# ---------------------------------------------------------------------------
def _invert_kernel(x_ref, o_ref):
    if jnp.issubdtype(x_ref.dtype, jnp.floating):
        bound = jnp.asarray(1.0, dtype=x_ref.dtype)
    else:
        # TODO(synk): bool images (torchvision supports logical-not) are not
        # handled; only float / integer dtypes are in scope here.
        bound = jnp.asarray(jnp.iinfo(x_ref.dtype).max, dtype=x_ref.dtype)
    o_ref[...] = bound - x_ref[...]


# ---------------------------------------------------------------------------
# Block planning (all trace-time Python ints)
# ---------------------------------------------------------------------------
def _round_up(x, m):
    return ((x + m - 1) // m) * m


def _cdiv(a, b):
    return -(-a // b)


def _plan(rows, itemsize):
    """Pick (block_rows, num_blocks) for a (rows, 128) lane-dense slab."""
    sublane = max(8, 32 // itemsize)            # 8 f32 / 16 bf16 / 32 u8
    max_rows = _MAX_BLOCK_BYTES // (_LANE * itemsize)
    max_rows = max(sublane, (max_rows // sublane) * sublane)
    if rows <= max_rows:
        return rows, 1                          # single full-array block
    block_rows = max_rows
    num_blocks = _cdiv(rows, block_rows)
    # Keep >= 4 and an even number of grid steps: overlaps DMA with compute and
    # gives both v7x TensorCores balanced work on the "parallel" axis.
    if num_blocks < 4:
        block_rows = max(sublane, _round_up(_cdiv(rows, 4), sublane))
    elif num_blocks % 2 == 1:
        block_rows = max(sublane, _round_up(_cdiv(rows, num_blocks + 1), sublane))
    num_blocks = _cdiv(rows, block_rows)
    return block_rows, num_blocks


# ---------------------------------------------------------------------------
# pallas_call wrapper on a lane-dense (rows, 128) slab
# ---------------------------------------------------------------------------
def _invert_2d(x2):
    rows = x2.shape[0]
    itemsize = jnp.dtype(x2.dtype).itemsize
    block_rows, num_blocks = _plan(rows, itemsize)
    total = rows * _LANE
    return pl.pallas_call(
        _invert_kernel,
        out_shape=jax.ShapeDtypeStruct((rows, _LANE), x2.dtype),
        grid_spec=pltpu.PrefetchScalarGridSpec(
            num_scalar_prefetch=0,
            grid=(num_blocks,),
            in_specs=[pl.BlockSpec((block_rows, _LANE), lambda i: (i, 0))],
            out_specs=pl.BlockSpec((block_rows, _LANE), lambda i: (i, 0)),
        ),
        compiler_params=pltpu.CompilerParams(
            dimension_semantics=("parallel",),
            vmem_limit_bytes=_VMEM_LIMIT_BYTES,
        ),
        cost_estimate=pl.CostEstimate(
            flops=total,
            transcendentals=0,
            bytes_accessed=2 * total * itemsize,
        ),
    )(x2)


@jax.jit
def _invert_jit(img):
    shape = img.shape
    total = int(np.prod(shape))
    if total % _LANE == 0:
        # Common case (e.g. NCHW images): pure layout-preserving reshape,
        # no extra HBM copies around the kernel.
        out2 = _invert_2d(img.reshape(total // _LANE, _LANE))
        return out2.reshape(shape)
    # Ragged fallback: pad to a whole number of 128-lane rows, slice back.
    rows = _cdiv(total, _LANE)
    x_flat = jnp.ravel(img)
    x_flat = jnp.pad(x_flat, (0, rows * _LANE - total))
    out2 = _invert_2d(x_flat.reshape(rows, _LANE))
    return out2.reshape(-1)[:total].reshape(shape)


def invert_pallas(img, flag):
    """flag: 0 -> passthrough (no kernel launch), nonzero -> bound - img."""
    if not flag:
        return img          # host-side short-circuit: zero HBM traffic
    return _invert_jit(img)


# ---------------------------------------------------------------------------
# Module-equivalent wrapper
# ---------------------------------------------------------------------------
class RandomInvertPallas:
    def __init__(self, p=0.5, seed=0):
        self.p = p
        self._rng = np.random.default_rng(seed)
        # TODO(synk): the Bernoulli draw (torch.rand(1).item()) is host-side in
        # the original module; it stays host-side here (not an in-kernel RNG).

    def __call__(self, img, return_params=False):
        param = 1.0 if float(self._rng.uniform()) < self.p else 0.0
        out = _invert_jit(img) if param == 1.0 else img
        if return_params:
            return out, param
        return out

    def __repr__(self):
        return self.__class__.__name__ + "(p={})".format(self.p)


if __name__ == "__main__":
    key = jax.random.PRNGKey(0)
    # Small NCHW image batch: batch=2, channels=4, spatial=16x16 (float in [0,1])
    img = jax.random.uniform(key, (2, 4, 16, 16), dtype=jnp.float32)

    # Invert branch (kernel) and identity branch (host short-circuit).
    out_inv = jax.block_until_ready(invert_pallas(img, 1))
    out_id = invert_pallas(img, 0)
    assert out_inv.shape == img.shape and out_inv.dtype == img.dtype
    assert jnp.allclose(out_inv, 1.0 - img, atol=1e-6)
    assert jnp.allclose(out_id, img)

    # Ragged size (not a multiple of 128) exercises the pad fallback.
    img_odd = jax.random.uniform(jax.random.PRNGKey(1), (3, 5, 7), dtype=jnp.float32)
    out_odd = jax.block_until_ready(invert_pallas(img_odd, 1))
    assert out_odd.shape == img_odd.shape
    assert jnp.allclose(out_odd, 1.0 - img_odd, atol=1e-6)

    # uint8 image (the common torchvision case): bound = 255.
    img_u8 = jax.random.randint(
        jax.random.PRNGKey(2), (2, 32, 64), 0, 256, dtype=jnp.int32
    ).astype(jnp.uint8)
    out_u8 = jax.block_until_ready(invert_pallas(img_u8, 1))
    expected_u8 = (255 - img_u8.astype(jnp.int32)).astype(jnp.uint8)
    assert out_u8.dtype == jnp.uint8
    assert jnp.array_equal(out_u8, expected_u8)

    # Module-equivalent randomized call.
    op = RandomInvertPallas(p=0.5, seed=0)
    out, param = op(img, return_params=True)
    out = jax.block_until_ready(out)
    expected = (1.0 - img) if param == 1.0 else img
    assert out.shape == (2, 4, 16, 16)
    assert out.dtype == jnp.float32
    assert jnp.allclose(out, expected, atol=1e-6)
    assert jnp.all(jnp.isfinite(out))
    print("KERNEL_OK")
</pallas_src>

<mosaic_0001>
module attributes {stable_mosaic.version = 11 : i64} {
  func.func @_invert_kernel(%arg0: i32, %arg1: memref<16x128xf32, #tpu.memory_space<vmem>>, %arg2: memref<16x128xf32, #tpu.memory_space<vmem>>) attributes {dimension_semantics = [#tpu.dimension_semantics<parallel>], iteration_bounds = array<i64: 1>, scalar_prefetch = 0 : i64, scratch_operands = 0 : i64, tpu.core_type = #tpu.core_type<tc>, window_params = [{transform_indices = @transform_0, window_bounds = array<i64: 16, 128>}, {transform_indices = @transform_1, window_bounds = array<i64: 16, 128>}]} {
    %c0 = arith.constant 0 : index
    %c0_0 = arith.constant 0 : index
    %0 = vector.load %arg1[%c0, %c0_0] : memref<16x128xf32, #tpu.memory_space<vmem>>, vector<16x128xf32>
    %cst = arith.constant 1.000000e+00 : f32
    %1 = vector.broadcast %cst : f32 to vector<16x128xf32>
    %2 = arith.subf %1, %0 : vector<16x128xf32>
    %c0_1 = arith.constant 0 : index
    %c0_2 = arith.constant 0 : index
    %3 = vector.load %arg2[%c0_1, %c0_2] : memref<16x128xf32, #tpu.memory_space<vmem>>, vector<16x128xf32>
    tpu.vector_store %arg2[%c0_1, %c0_2], %2 {strides = array<i32>} : memref<16x128xf32, #tpu.memory_space<vmem>>, vector<16x128xf32>,
    return
  }
  func.func @transform_0(%arg0: i32) -> (i32, i32) {
    %c0_i32 = arith.constant 0 : i32
    %c0_i32_0 = arith.constant 0 : i32
    return %arg0, %c0_i32 : i32, i32
  }
  func.func @transform_1(%arg0: i32) -> (i32, i32) {
    %c0_i32 = arith.constant 0 : i32
    %c0_i32_0 = arith.constant 0 : i32
    return %arg0, %c0_i32 : i32, i32
  }
}

</mosaic_0001>

<llo_original>
// kernel: _invert_jit.1
$region0: #{_invert_jit.1}
  #allocation0 [shape = 'u32[]', space=smem, size = 0x4, offset = 0x4, fixed_abs, tag = 'smem constant byte address 0x4 - core index']
  #allocation1 [shape = 'u32[72,128]{1,0:T(1,128)}', space=vmem, size = 0x9000, scoped, tag = 'internal scratch']
  %s0 = inlined_call_operand.vmem [shape: f32[16,128], index: 0, kind: input, shape index: {}]
  %s1 = inlined_call_operand.vmem [shape: f32[16,128], index: 1, kind: output, shape index: {}]
  %s2 = sld [smem:[#allocation0]]
  $region14: #{_invert_jit.1} parent=0
    _
  %s4 = ssub.s32 1, %s2
  %s5 = scalar_select 0, %s4, %s2
  // Predicated region
  $region2: #{_invert_jit.1} parent=0 // pred_check
    _
  $region3: #{_invert_jit.1} parent=0 // pred_check_branch
    %7 = sbr.rel (0) target = $region5
  $region4: #{_invert_jit.1} parent=0 // pred_region
    _
  $region5: #{_invert_jit.1} parent=0 // pred_fallthru
    _
  %v8 = vld [vmem:[%s0] sm:$0xff]
  %v9 = vld [vmem:[%s0 + $0x8] sm:$0xff]
  %v10 = vsub.f32 1.0, %v8
  %v11 = vsub.f32 1.0, %v9
  %12 = vst [vmem:[%s1] sm:$0xff] %v10
  %13 = vst [vmem:[%s1 + $0x8] sm:$0xff] %v11
  // Predicated region
  $region6: #{_invert_jit.1} parent=0 // pred_check
    _
  $region7: #{_invert_jit.1} parent=0 // pred_check_branch
    %15 = sbr.rel (0) target = $region9
  $region8: #{_invert_jit.1} parent=0 // pred_region
    _
  $region9: #{_invert_jit.1} parent=0 // pred_fallthru
    _
  // Predicated region
  $region10: #{_invert_jit.1} parent=0 // pred_check
    _
  $region11: #{_invert_jit.1} parent=0 // pred_check_branch
    %17 = sbr.rel (0) target = $region13
  $region12: #{_invert_jit.1} parent=0 // pred_region
    _
  $region13: #{_invert_jit.1} parent=0 // pred_fallthru
    _

</llo_original>
